<compile_context>
chip_gen: v7x
topology: tpu7x:2x2x1
jax: 0.10.0
libtpu: 0.0.40
codegen_flags: <defaults>
</compile_context>

<pallas_src>
import jax
import jax.numpy as jnp
from jax.experimental import pallas as pl
from jax.experimental.pallas import tpu as pltpu

H1, H2 = 400, 300      # logical hidden sizes from the PyTorch Actor
LANE = 128
SUBLANE = 8


def _round_up(x, m):
    return (x + m - 1) // m * m


def actor_kernel(x_ref, w1_ref, b1_ref, w2_ref, b2_ref, w3_ref, b3_ref, o_ref):
    # layer1: Linear(state_dim, 400) + ReLU  (bf16 MXU inputs, f32 accumulate)
    x = x_ref[...].astype(jnp.bfloat16)
    h1 = jnp.dot(x, w1_ref[...], preferred_element_type=jnp.float32)
    # Bias add + ReLU in f32 (v5e-safe VPU path), then fused downcast so only
    # the bf16 intermediate stays live into the next MXU op.
    h1 = jnp.maximum(h1 + b1_ref[...], 0.0).astype(jnp.bfloat16)
    # layer2: Linear(400, 300) + ReLU
    h2 = jnp.dot(h1, w2_ref[...], preferred_element_type=jnp.float32)
    h2 = jnp.maximum(h2 + b2_ref[...], 0.0).astype(jnp.bfloat16)
    # layer3: Linear(300, action_dim) + tanh
    h3 = jnp.dot(h2, w3_ref[...], preferred_element_type=jnp.float32)
    o_ref[...] = jnp.tanh(h3 + b3_ref[...]).astype(o_ref.dtype)


def pack_actor_params(params_f32):
    """Zero-pad hidden/output dims to lane multiples; cast weights to bf16.

    The input (state_dim) dim of w1 is NOT padded: the kernel dots the
    native-width state block directly against it. Zero padding elsewhere is
    numerically exact (padded bias entries are zero, ReLU(0)=0, tanh(0)=0,
    padded output columns are sliced off in the wrapper).
    """
    def pad_to(a, shape):
        return jnp.pad(a, [(0, t - s) for s, t in zip(a.shape, shape)])

    state_dim = params_f32["w1"].shape[0]
    action_dim = params_f32["w3"].shape[1]
    h1_p = _round_up(H1, LANE)           # 512
    h2_p = _round_up(H2, LANE)           # 384
    out_p = _round_up(action_dim, LANE)  # 128

    return {
        "w1": pad_to(params_f32["w1"], (state_dim, h1_p)).astype(jnp.bfloat16),
        "b1": pad_to(params_f32["b1"], (1, h1_p)),            # f32, zero-padded
        "w2": pad_to(params_f32["w2"], (h1_p, h2_p)).astype(jnp.bfloat16),
        "b2": pad_to(params_f32["b2"], (1, h2_p)),
        "w3": pad_to(params_f32["w3"], (h2_p, out_p)).astype(jnp.bfloat16),
        "b3": pad_to(params_f32["b3"], (1, out_p)),
    }


def actor_forward(state, packed, action_dim):
    """state: (B, state_dim) f32 -> (B, action_dim) f32."""
    B, state_dim = state.shape
    w1, b1 = packed["w1"], packed["b1"]
    w2, b2 = packed["w2"], packed["b2"]
    w3, b3 = packed["w3"], packed["b3"]
    out_p = w3.shape[1]

    # Batch tiling: tiles up to 512 rows; when the batch allows, split into
    # >= 2 tiles so the "parallel" grid axis can use both TensorCores on v7x.
    b_pad = _round_up(B, SUBLANE)
    tile_b = min(512, max(SUBLANE, _round_up(b_pad // 2, SUBLANE)))
    b_pad = _round_up(b_pad, tile_b)
    grid = (b_pad // tile_b,)

    # Only row padding (to a tile multiple). The feature dim stays native
    # width, so streamed input DMA is B*state_dim, not B*128.
    x = state if b_pad == B else jnp.pad(state, ((0, b_pad - B), (0, 0)))

    def const_spec(shape):
        return pl.BlockSpec(shape, lambda i: (0,) * len(shape))

    out_padded = pl.pallas_call(
        actor_kernel,
        out_shape=jax.ShapeDtypeStruct((b_pad, out_p), jnp.bfloat16),
        grid=grid,
        in_specs=[
            pl.BlockSpec((tile_b, state_dim), lambda i: (i, 0)),  # streamed state
            const_spec(w1.shape), const_spec(b1.shape),           # resident weights
            const_spec(w2.shape), const_spec(b2.shape),
            const_spec(w3.shape), const_spec(b3.shape),
        ],
        out_specs=pl.BlockSpec((tile_b, out_p), lambda i: (i, 0)),
        compiler_params=pltpu.CompilerParams(
            dimension_semantics=("parallel",)),
    )(x, w1, b1, w2, b2, w3, b3)

    # Slice off padded rows/cols; cast back to f32 for API parity with the
    # PyTorch module (cheap: only B * action_dim elements touched).
    return out_padded[:B, :action_dim].astype(jnp.float32)


def init_actor_params(key, state_dim, action_dim):
    """Logical f32 params mimicking PyTorch nn.Linear default init."""
    dims = [(state_dim, H1), (H1, H2), (H2, action_dim)]
    params = {}
    for i, (fan_in, fan_out) in enumerate(dims, start=1):
        key, kw, kb = jax.random.split(key, 3)
        bound = 1.0 / jnp.sqrt(jnp.float32(fan_in))
        # stored as (in, out): PyTorch weight (out, in) transposed
        params[f"w{i}"] = jax.random.uniform(
            kw, (fan_in, fan_out), jnp.float32, -bound, bound)
        params[f"b{i}"] = jax.random.uniform(
            kb, (1, fan_out), jnp.float32, -bound, bound)
    return params


def actor_reference(state, params):
    """Plain-JAX f32 reference for correctness check."""
    h1 = jnp.maximum(state @ params["w1"] + params["b1"], 0.0)
    h2 = jnp.maximum(h1 @ params["w2"] + params["b2"], 0.0)
    return jnp.tanh(h2 @ params["w3"] + params["b3"])


if __name__ == "__main__":
    key = jax.random.PRNGKey(0)
    B, state_dim, action_dim = 8, 16, 4

    key, k_state = jax.random.split(key)
    state = jax.random.normal(k_state, (B, state_dim), jnp.float32)
    params = init_actor_params(key, state_dim, action_dim)
    packed = pack_actor_params(params)

    out = actor_forward(state, packed, action_dim)
    out = jax.block_until_ready(out)

    ref = actor_reference(state, params)
    assert out.shape == (B, action_dim), out.shape
    # bf16 weights + bf16 output (tanh in [-1,1]) -> loosened tolerance vs f32
    # reference. If DDPG action precision matters, keep w3/b3 and the output
    # in f32 (negligible cost at these sizes).
    assert jnp.allclose(out, ref, atol=3e-2, rtol=3e-2), "mismatch vs reference"

    print("KERNEL_OK")
</pallas_src>

<mosaic_0001>
module attributes {stable_mosaic.version = 11 : i64} {
  func.func @actor_kernel(%arg0: i32, %arg1: memref<8x16xf32, #tpu.memory_space<vmem>>, %arg2: memref<16x512xbf16, #tpu.memory_space<vmem>>, %arg3: memref<1x512xf32, #tpu.memory_space<vmem>>, %arg4: memref<512x384xbf16, #tpu.memory_space<vmem>>, %arg5: memref<1x384xf32, #tpu.memory_space<vmem>>, %arg6: memref<384x128xbf16, #tpu.memory_space<vmem>>, %arg7: memref<1x128xf32, #tpu.memory_space<vmem>>, %arg8: memref<8x128xbf16, #tpu.memory_space<vmem>>) attributes {dimension_semantics = [#tpu.dimension_semantics<parallel>], iteration_bounds = array<i64: 1>, scalar_prefetch = 0 : i64, scratch_operands = 0 : i64, tpu.core_type = #tpu.core_type<tc>, window_params = [{transform_indices = @transform_0, window_bounds = array<i64: 8, 16>}, {pipeline_mode = #tpu.pipeline_mode<synchronous>, transform_indices = @transform_1, window_bounds = array<i64: 16, 512>}, {pipeline_mode = #tpu.pipeline_mode<synchronous>, transform_indices = @transform_2, window_bounds = array<i64: 1, 512>}, {pipeline_mode = #tpu.pipeline_mode<synchronous>, transform_indices = @transform_3, window_bounds = array<i64: 512, 384>}, {pipeline_mode = #tpu.pipeline_mode<synchronous>, transform_indices = @transform_4, window_bounds = array<i64: 1, 384>}, {pipeline_mode = #tpu.pipeline_mode<synchronous>, transform_indices = @transform_5, window_bounds = array<i64: 384, 128>}, {pipeline_mode = #tpu.pipeline_mode<synchronous>, transform_indices = @transform_6, window_bounds = array<i64: 1, 128>}, {transform_indices = @transform_7, window_bounds = array<i64: 8, 128>}]} {
    %c0 = arith.constant 0 : index
    %c0_0 = arith.constant 0 : index
    %0 = vector.load %arg1[%c0, %c0_0] : memref<8x16xf32, #tpu.memory_space<vmem>>, vector<8x16xf32>
    %1 = arith.truncf %0 : vector<8x16xf32> to vector<8x16xbf16>
    %c0_1 = arith.constant 0 : index
    %c0_2 = arith.constant 0 : index
    %2 = vector.load %arg2[%c0_1, %c0_2] : memref<16x512xbf16, #tpu.memory_space<vmem>>, vector<16x512xbf16>
    %cst = arith.constant dense<0.000000e+00> : vector<8x512xf32>
    %3 = tpu.matmul %1, %2, %cst {dimension_numbers = #tpu.dot_dimension_numbers<[1], [0], [0], [1], [0, 0, 1, 1], [], []>} : vector<8x16xbf16>, vector<16x512xbf16>, vector<8x512xf32> -> vector<8x512xf32>
    %c0_3 = arith.constant 0 : index
    %c0_4 = arith.constant 0 : index
    %4 = vector.load %arg3[%c0_3, %c0_4] : memref<1x512xf32, #tpu.memory_space<vmem>>, vector<1x512xf32>
    %5 = vector.broadcast %4 : vector<1x512xf32> to vector<8x512xf32>
    %6 = arith.addf %3, %5 : vector<8x512xf32>
    %cst_5 = arith.constant 0.000000e+00 : f32
    %7 = vector.broadcast %cst_5 : f32 to vector<8x512xf32>
    %8 = arith.maximumf %6, %7 : vector<8x512xf32>
    %9 = arith.truncf %8 : vector<8x512xf32> to vector<8x512xbf16>
    %c0_6 = arith.constant 0 : index
    %c0_7 = arith.constant 0 : index
    %10 = vector.load %arg4[%c0_6, %c0_7] : memref<512x384xbf16, #tpu.memory_space<vmem>>, vector<512x384xbf16>
    %cst_8 = arith.constant dense<0.000000e+00> : vector<8x384xf32>
    %11 = tpu.matmul %9, %10, %cst_8 {dimension_numbers = #tpu.dot_dimension_numbers<[1], [0], [0], [1], [0, 0, 1, 1], [], []>} : vector<8x512xbf16>, vector<512x384xbf16>, vector<8x384xf32> -> vector<8x384xf32>
    %c0_9 = arith.constant 0 : index
    %c0_10 = arith.constant 0 : index
    %12 = vector.load %arg5[%c0_9, %c0_10] : memref<1x384xf32, #tpu.memory_space<vmem>>, vector<1x384xf32>
    %13 = vector.broadcast %12 : vector<1x384xf32> to vector<8x384xf32>
    %14 = arith.addf %11, %13 : vector<8x384xf32>
    %cst_11 = arith.constant 0.000000e+00 : f32
    %15 = vector.broadcast %cst_11 : f32 to vector<8x384xf32>
    %16 = arith.maximumf %14, %15 : vector<8x384xf32>
    %17 = arith.truncf %16 : vector<8x384xf32> to vector<8x384xbf16>
    %c0_12 = arith.constant 0 : index
    %c0_13 = arith.constant 0 : index
    %18 = vector.load %arg6[%c0_12, %c0_13] : memref<384x128xbf16, #tpu.memory_space<vmem>>, vector<384x128xbf16>
    %cst_14 = arith.constant dense<0.000000e+00> : vector<8x128xf32>
    %19 = tpu.matmul %17, %18, %cst_14 {dimension_numbers = #tpu.dot_dimension_numbers<[1], [0], [0], [1], [0, 0, 1, 1], [], []>} : vector<8x384xbf16>, vector<384x128xbf16>, vector<8x128xf32> -> vector<8x128xf32>
    %c0_15 = arith.constant 0 : index
    %c0_16 = arith.constant 0 : index
    %20 = vector.load %arg7[%c0_15, %c0_16] : memref<1x128xf32, #tpu.memory_space<vmem>>, vector<1x128xf32>
    %21 = vector.broadcast %20 : vector<1x128xf32> to vector<8x128xf32>
    %22 = arith.addf %19, %21 : vector<8x128xf32>
    %23 = math.tanh %22 : vector<8x128xf32>
    %24 = arith.truncf %23 : vector<8x128xf32> to vector<8x128xbf16>
    %c0_17 = arith.constant 0 : index
    %c0_18 = arith.constant 0 : index
    %25 = vector.load %arg8[%c0_17, %c0_18] : memref<8x128xbf16, #tpu.memory_space<vmem>>, vector<8x128xbf16>
    tpu.vector_store %arg8[%c0_17, %c0_18], %24 {strides = array<i32>} : memref<8x128xbf16, #tpu.memory_space<vmem>>, vector<8x128xbf16>,
    return
  }
  func.func @transform_0(%arg0: i32) -> (i32, i32) {
    %c0_i32 = arith.constant 0 : i32
    %c0_i32_0 = arith.constant 0 : i32
    return %arg0, %c0_i32 : i32, i32
  }
  func.func @transform_1(%arg0: i32) -> (i32, i32) {
    %c0_i32 = arith.constant 0 : i32
    %c0_i32_0 = arith.constant 0 : i32
    %c0_i32_1 = arith.constant 0 : i32
    return %c0_i32, %c0_i32_0 : i32, i32
  }
  func.func @transform_2(%arg0: i32) -> (i32, i32) {
    %c0_i32 = arith.constant 0 : i32
    %c0_i32_0 = arith.constant 0 : i32
    %c0_i32_1 = arith.constant 0 : i32
    return %c0_i32, %c0_i32_0 : i32, i32
  }
  func.func @transform_3(%arg0: i32) -> (i32, i32) {
    %c0_i32 = arith.constant 0 : i32
    %c0_i32_0 = arith.constant 0 : i32
    %c0_i32_1 = arith.constant 0 : i32
    return %c0_i32, %c0_i32_0 : i32, i32
  }
  func.func @transform_4(%arg0: i32) -> (i32, i32) {
    %c0_i32 = arith.constant 0 : i32
    %c0_i32_0 = arith.constant 0 : i32
    %c0_i32_1 = arith.constant 0 : i32
    return %c0_i32, %c0_i32_0 : i32, i32
  }
  func.func @transform_5(%arg0: i32) -> (i32, i32) {
    %c0_i32 = arith.constant 0 : i32
    %c0_i32_0 = arith.constant 0 : i32
    %c0_i32_1 = arith.constant 0 : i32
    return %c0_i32, %c0_i32_0 : i32, i32
  }
  func.func @transform_6(%arg0: i32) -> (i32, i32) {
    %c0_i32 = arith.constant 0 : i32
    %c0_i32_0 = arith.constant 0 : i32
    %c0_i32_1 = arith.constant 0 : i32
    return %c0_i32, %c0_i32_0 : i32, i32
  }
  func.func @transform_7(%arg0: i32) -> (i32, i32) {
    %c0_i32 = arith.constant 0 : i32
    %c0_i32_0 = arith.constant 0 : i32
    return %arg0, %c0_i32 : i32, i32
  }
}

</mosaic_0001>

<llo_original>
// kernel: tpu_custom_call.1
$region0: #{tpu_custom_call.1}
  #allocation0 [shape = 'u32[]', space=smem, size = 0x4, offset = 0x4, fixed_abs, tag = 'smem constant byte address 0x4 - core index']
  #allocation1 [shape = 'u32[144,128]{1,0:T(1,128)}', space=vmem, size = 0x12000, scoped, tag = 'internal scratch']
  %s0 = inlined_call_operand.hbm [shape: f32[8,16], index: 0, kind: input, shape index: {}]
  %s1 = inlined_call_operand.hbm [shape: bf16[16,512], index: 1, kind: input, shape index: {}]
  %s2 = inlined_call_operand.vmem [shape: f32[1,512], index: 2, kind: input, shape index: {}]
  %s3 = inlined_call_operand.hbm [shape: bf16[512,384], index: 3, kind: input, shape index: {}]
  %s4 = inlined_call_operand.vmem [shape: f32[1,384], index: 4, kind: input, shape index: {}]
  %s5 = inlined_call_operand.hbm [shape: bf16[384,128], index: 5, kind: input, shape index: {}]
  %s6 = inlined_call_operand.vmem [shape: f32[1,128], index: 6, kind: input, shape index: {}]
  %s7 = inlined_call_operand.hbm [shape: bf16[8,128], index: 7, kind: output, shape index: {}]
  %s8 = sld [smem:[#allocation0]]
  $region54: #{tpu_custom_call.1} parent=0
    _
  %s10 = ssub.s32 1, %s8
  %s11 = scalar_select 0, %s10, %s8
  $region1: #{tpu_custom_call.1} parent=0
    #allocation2 [shape = 'u8[4096]{0}', space=vmem, size = 0x1000, scoped, tag = 'input window, operand 0, single buffered']
    #allocation3 [shape = 's32[1]{0}', space=sflag, size = 0x4, scoped, tag = 'scoped memory for tpu_custom_call.1']
    #allocation4 [shape = 's32[1]{0}', space=sflag, size = 0x4, scoped, tag = 'scoped memory for tpu_custom_call.1']
    #allocation5 [shape = 'u8[16384]{0}', space=vmem, size = 0x4000, scoped, tag = 'input window, operand 1, single buffered']
    #allocation6 [shape = 's32[1]{0}', space=sflag, size = 0x4, scoped, tag = 'scoped memory for tpu_custom_call.1']
    #allocation7 [shape = 'u8[393216]{0}', space=vmem, size = 0x60000, scoped, tag = 'input window, operand 3, single buffered']
    #allocation8 [shape = 'u8[98304]{0}', space=vmem, size = 0x18000, scoped, tag = 'input window, operand 5, single buffered']
    #allocation9 [shape = 's32[1]{0}', space=sflag, size = 0x4, scoped, tag = 'scoped memory for tpu_custom_call.1']
    #allocation10 [shape = 'u8[2048]{0}', space=vmem, size = 0x800, scoped, tag = 'output window, operand 0, single buffered']
    %12 = vsyncpa [#allocation3], 0
    %13 = vsyncpa [#allocation6], 0
    %14 = vsyncpa [#allocation9], 0
    %15 = vsyncpa [#allocation4], 0
    // Predicated region
    $region2: #{tpu_custom_call.1} parent=1 // pred_check
      _
    $region3: #{tpu_custom_call.1} parent=1 // pred_check_branch
      %17 = sbr.rel (0) target = $region5
    $region4: #{tpu_custom_call.1} parent=1 // pred_region
      %s19 = ssub.s32 128, 128
      %20 = vsyncadd [#allocation3], %s19
      %s22 = sshll.u32 [#allocation2], 4
      %s23 = int_to_ptr.vmem [resolvable:$true] %s22
      %25 = dma.hbm_to_vmem [thread:$0]  %s0, 128, %s23, [#allocation3]
    $region5: #{tpu_custom_call.1} parent=1 // pred_fallthru
      _
    // Predicated region
    $region6: #{tpu_custom_call.1} parent=1 // pred_check
      _
    $region7: #{tpu_custom_call.1} parent=1 // pred_check_branch
      %27 = sbr.rel (0) target = $region9
    $region8: #{tpu_custom_call.1} parent=1 // pred_region
      %s29 = ssub.s32 512, 512
      %30 = vsyncadd [#allocation6], %s29
      %s31 = sshll.u32 [#allocation5], 4
      %s32 = int_to_ptr.vmem [resolvable:$true] %s31
      %37 = dma.hbm_to_vmem [thread:$0]  %s1, 512, %s32, [#allocation6], 256, 256, 16
    $region9: #{tpu_custom_call.1} parent=1 // pred_fallthru
      _
    // Predicated region
    $region10: #{tpu_custom_call.1} parent=1 // pred_check
      _
    $region11: #{tpu_custom_call.1} parent=1 // pred_check_branch
      %39 = sbr.rel (0) target = $region13
    $region12: #{tpu_custom_call.1} parent=1 // pred_region
      _
    $region13: #{tpu_custom_call.1} parent=1 // pred_fallthru
      _
    // Predicated region
    $region14: #{tpu_custom_call.1} parent=1 // pred_check
      _
    $region15: #{tpu_custom_call.1} parent=1 // pred_check_branch
      %41 = sbr.rel (0) target = $region17
    $region16: #{tpu_custom_call.1} parent=1 // pred_region
      %s43 = ssub.s32 12288, 12288
      %44 = vsyncadd [#allocation6], %s43
      %s45 = sshll.u32 [#allocation7], 4
      %s46 = int_to_ptr.vmem [resolvable:$true] %s45
      %51 = dma.hbm_to_vmem [thread:$0]  %s3, 12288, %s46, [#allocation6], 192, 192, 12
    $region17: #{tpu_custom_call.1} parent=1 // pred_fallthru
      _
    // Predicated region
    $region18: #{tpu_custom_call.1} parent=1 // pred_check
      _
    $region19: #{tpu_custom_call.1} parent=1 // pred_check_branch
      %53 = sbr.rel (0) target = $region21
    $region20: #{tpu_custom_call.1} parent=1 // pred_region
      _
    $region21: #{tpu_custom_call.1} parent=1 // pred_fallthru
      _
    // Predicated region
    $region22: #{tpu_custom_call.1} parent=1 // pred_check
      _
    $region23: #{tpu_custom_call.1} parent=1 // pred_check_branch
      %55 = sbr.rel (0) target = $region25
    $region24: #{tpu_custom_call.1} parent=1 // pred_region
      %s57 = ssub.s32 3072, 3072
      %58 = vsyncadd [#allocation9], %s57
      %s59 = sshll.u32 [#allocation8], 4
      %s60 = int_to_ptr.vmem [resolvable:$true] %s59
      %65 = dma.hbm_to_vmem [thread:$0]  %s5, 3072, %s60, [#allocation9], 64, 64, 4
    $region25: #{tpu_custom_call.1} parent=1 // pred_fallthru
      _
    // Predicated region
    $region26: #{tpu_custom_call.1} parent=1 // pred_check
      _
    $region27: #{tpu_custom_call.1} parent=1 // pred_check_branch
      %67 = sbr.rel (0) target = $region29
    $region28: #{tpu_custom_call.1} parent=1 // pred_region
      _
    $region29: #{tpu_custom_call.1} parent=1 // pred_fallthru
      _
    // Predicated region
    $region30: #{tpu_custom_call.1} parent=1 // pred_check
      _
    $region31: #{tpu_custom_call.1} parent=1 // pred_check_branch
      %69 = sbr.rel (0) target = $region33
    $region32: #{tpu_custom_call.1} parent=1 // pred_region
      %70 = dma.done [#allocation3], 128
    $region33: #{tpu_custom_call.1} parent=1 // pred_fallthru
      _
    // Predicated region
    $region34: #{tpu_custom_call.1} parent=1 // pred_check
      _
    $region35: #{tpu_custom_call.1} parent=1 // pred_check_branch
      %72 = sbr.rel (0) target = $region37
    $region36: #{tpu_custom_call.1} parent=1 // pred_region
      %73 = dma.done [#allocation6], 512
    $region37: #{tpu_custom_call.1} parent=1 // pred_fallthru
      _
    // Predicated region
    $region38: #{tpu_custom_call.1} parent=1 // pred_check
      _
    $region39: #{tpu_custom_call.1} parent=1 // pred_check_branch
      %75 = sbr.rel (0) target = $region41
    $region40: #{tpu_custom_call.1} parent=1 // pred_region
      %76 = dma.done [#allocation6], 12288
    $region41: #{tpu_custom_call.1} parent=1 // pred_fallthru
      _
    // Predicated region
    $region42: #{tpu_custom_call.1} parent=1 // pred_check
      _
    $region43: #{tpu_custom_call.1} parent=1 // pred_check_branch
      %78 = sbr.rel (0) target = $region45
    $region44: #{tpu_custom_call.1} parent=1 // pred_region
      %79 = dma.done [#allocation9], 3072
    $region45: #{tpu_custom_call.1} parent=1 // pred_fallthru
      _
    %v81 = vld [vmem:[#allocation2] sm:$0xff]
    %v82 = vpack.c.bf16 %v81, %v81
    %v83 = vld [vmem:[#allocation5] sm:$0xff]
    %v84 = vld [vmem:[#allocation5 + $0x8] sm:$0xff]
    %v85 = vld [vmem:[#allocation5 + $0x10] sm:$0xff]
    %v86 = vld [vmem:[#allocation5 + $0x18] sm:$0xff]
    %v87 = vld [vmem:[%s2] sm:$0xf]
    %v89 = vlaneseq
    %v90 = vshrl.u32 %v89, 7
    %v91 = vsub.s32 0, %v90
    %v92 = vrot.slane %v87, %v91
    %v93 = vlaneseq
    %v94 = vshrl.u32 %v93, 7
    %v95 = vsub.s32 1, %v94
    %v96 = vrot.slane %v87, %v95
    %v97 = vlaneseq
    %v98 = vshrl.u32 %v97, 7
    %v99 = vsub.s32 2, %v98
    %v100 = vrot.slane %v87, %v99
    %v101 = vlaneseq
    %v102 = vshrl.u32 %v101, 7
    %v103 = vsub.s32 3, %v102
    %v104 = vrot.slane %v87, %v103
    %v113 = vunpack.c.l.b16 %v83
    %v114 = vunpack.c.h.b16 %v83
    %v115 = vunpack.c.l.b16 %v84
    %v116 = vunpack.c.h.b16 %v84
    %v117 = vunpack.c.l.b16 %v85
    %v118 = vunpack.c.h.b16 %v85
    %v119 = vunpack.c.l.b16 %v86
    %v120 = vunpack.c.h.b16 %v86
    %v121 = vpack.c.b16 %v117, %v113
    %v122 = vpack.c.b16 %v118, %v114
    %v123 = vpack.c.b16 %v119, %v115
    %v124 = vpack.c.b16 %v120, %v116
    %vm129 = vcmask 130048
    %v131 = vsel %vm129, %v82, 0
    %133 = vmatprep.subr.bf16.mxu0 %v122
    %134 = vmatpush1.bf16.msra.mxu0 %v121
    %135 = vmatprep.subr.bf16.mxu0 0
    %136 = vmatpush1.bf16.msra.mxu0 0
    %137 = vmatprep.subr.bf16.mxu0 0
    %138 = vmatpush1.bf16.msra.mxu0 0
    %139 = vmatprep.subr.bf16.mxu0 0
    %140 = vmatpush1.bf16.msra.mxu0 0
    %141 = vmatprep.subr.bf16.mxu0 0
    %142 = vmatpush1.bf16.msra.mxu0 0
    %143 = vmatprep.subr.bf16.mxu0 0
    %144 = vmatpush1.bf16.msra.mxu0 0
    %145 = vmatprep.subr.bf16.mxu0 0
    %146 = vmatpush1.bf16.msra.mxu0 0
    %147 = vmatprep.subr.bf16.mxu0 0
    %148 = vmatpush1.bf16.msra.mxu0 0
    %149 = vmatprep.subr.bf16.mxu0 0
    %150 = vmatpush1.bf16.msra.mxu0 0
    %151 = vmatprep.subr.bf16.mxu0 0
    %152 = vmatpush1.bf16.msra.mxu0 0
    %153 = vmatprep.subr.bf16.mxu0 0
    %154 = vmatpush1.bf16.msra.mxu0 0
    %155 = vmatprep.subr.bf16.mxu0 0
    %156 = vmatpush1.bf16.msra.mxu0 0
    %157 = vmatprep.subr.bf16.mxu0 0
    %158 = vmatpush1.bf16.msra.mxu0 0
    %159 = vmatprep.subr.bf16.mxu0 0
    %160 = vmatpush1.bf16.msra.mxu0 0
    %161 = vmatprep.subr.bf16.mxu0 0
    %162 = vmatpush1.bf16.msra.mxu0 0
    %163 = vmatprep.subr.bf16.mxu0 0
    %164 = vmatpush1.bf16.msra.mxu0 0
    %165 = vmatprep.mubr.bf16.mxu0 0
    %166 = vmatmul.mubr.bf16.gmra.mrb[0].mxu0 %v131
    %v167 = vpop.f32.mrb[0].mxu0
    %v168 = vadd.f32 %v92, %v167
    %v169 = vpop.f32.mrb[0].mxu0
    %v170 = vadd.f32 %v96, %v169
    %v171 = vpop.f32.mrb[0].mxu0
    %v172 = vpop.f32.mrb[0].mxu0
    %173 = vdwg.mxu0
    %174 = vmatprep.subr.bf16.mxu0 %v124
    %175 = vmatpush1.bf16.msra.mxu0 %v123
    %176 = vmatprep.subr.bf16.mxu0 0
    %177 = vmatpush1.bf16.msra.mxu0 0
    %178 = vmatprep.subr.bf16.mxu0 0
    %179 = vmatpush1.bf16.msra.mxu0 0
    %180 = vmatprep.subr.bf16.mxu0 0
    %181 = vmatpush1.bf16.msra.mxu0 0
    %182 = vmatprep.subr.bf16.mxu0 0
    %183 = vmatpush1.bf16.msra.mxu0 0
    %184 = vmatprep.subr.bf16.mxu0 0
    %185 = vmatpush1.bf16.msra.mxu0 0
    %186 = vmatprep.subr.bf16.mxu0 0
    %187 = vmatpush1.bf16.msra.mxu0 0
    %188 = vmatprep.subr.bf16.mxu0 0
    %189 = vmatpush1.bf16.msra.mxu0 0
    %190 = vmatprep.subr.bf16.mxu0 0
    %191 = vmatpush1.bf16.msra.mxu0 0
    %192 = vmatprep.subr.bf16.mxu0 0
    %193 = vmatpush1.bf16.msra.mxu0 0
    %194 = vmatprep.subr.bf16.mxu0 0
    %195 = vmatpush1.bf16.msra.mxu0 0
    %196 = vmatprep.subr.bf16.mxu0 0
    %197 = vmatpush1.bf16.msra.mxu0 0
    %198 = vmatprep.subr.bf16.mxu0 0
    %199 = vmatpush1.bf16.msra.mxu0 0
    %200 = vmatprep.subr.bf16.mxu0 0
    %201 = vmatpush1.bf16.msra.mxu0 0
    %202 = vmatprep.subr.bf16.mxu0 0
    %203 = vmatpush1.bf16.msra.mxu0 0
    %204 = vmatprep.subr.bf16.mxu0 0
    %205 = vmatpush1.bf16.msra.mxu0 0
    %206 = vmatprep.mubr.bf16.mxu0 0
    %207 = vmatmul.mubr.bf16.gmra.mrb[0].mxu0 %v131
    %v208 = vpop.f32.mrb[0].mxu0
    %v209 = vadd.f32 %v100, %v208
    %v210 = vpop.f32.mrb[0].mxu0
    %v211 = vadd.f32 %v104, %v210
    %v212 = vpop.f32.mrb[0].mxu0
    %v213 = vpop.f32.mrb[0].mxu0
    %214 = vdwg.mxu0
    %v215 = vmax.f32 %v168, 0.0
    %v216 = vmax.f32 %v170, 0.0
    %v217 = vmax.f32 %v209, 0.0
    %v218 = vmax.f32 %v211, 0.0
    %v219 = vpack.c.bf16 %v215, %v215
    %v220 = vpack.c.bf16 %v216, %v216
    %v221 = vpack.c.bf16 %v217, %v217
    %v222 = vpack.c.bf16 %v218, %v218
    %v223 = vld [vmem:[#allocation7] sm:$0xff]
    %v224 = vld [vmem:[#allocation7 + $0x8] sm:$0xf]
    %v225 = vld [vmem:[#allocation7 + $0xc] sm:$0xff]
    %v226 = vld [vmem:[#allocation7 + $0x14] sm:$0xf]
    %v227 = vld [vmem:[#allocation7 + $0x18] sm:$0xff]
    %v228 = vld [vmem:[#allocation7 + $0x20] sm:$0xf]
    %v229 = vld [vmem:[#allocation7 + $0x24] sm:$0xff]
    %v230 = vld [vmem:[#allocation7 + $0x2c] sm:$0xf]
    %v231 = vld [vmem:[#allocation7 + $0x30] sm:$0xff]
    %v232 = vld [vmem:[#allocation7 + $0x38] sm:$0xf]
    %v233 = vld [vmem:[#allocation7 + $0x3c] sm:$0xff]
    %v234 = vld [vmem:[#allocation7 + $0x44] sm:$0xf]
    %v235 = vld [vmem:[#allocation7 + $0x48] sm:$0xff]
    %v236 = vld [vmem:[#allocation7 + $0x50] sm:$0xf]
    %v237 = vld [vmem:[#allocation7 + $0x54] sm:$0xff]
    %v238 = vld [vmem:[#allocation7 + $0x5c] sm:$0xf]
    %v239 = vld [vmem:[#allocation7 + $0x60] sm:$0xff]
    %v240 = vld [vmem:[#allocation7 + $0x68] sm:$0xf]
    %v241 = vld [vmem:[#allocation7 + $0x6c] sm:$0xff]
    %v242 = vld [vmem:[#allocation7 + $0x74] sm:$0xf]
    %v243 = vld [vmem:[#allocation7 + $0x78] sm:$0xff]
    %v244 = vld [vmem:[#allocation7 + $0x80] sm:$0xf]
    %v245 = vld [vmem:[#allocation7 + $0x84] sm:$0xff]
    %v246 = vld [vmem:[#allocation7 + $0x8c] sm:$0xf]
    %v247 = vld [vmem:[#allocation7 + $0x90] sm:$0xff]
    %v248 = vld [vmem:[#allocation7 + $0x98] sm:$0xf]
    %v249 = vld [vmem:[#allocation7 + $0x9c] sm:$0xff]
    %v250 = vld [vmem:[#allocation7 + $0xa4] sm:$0xf]
    %v251 = vld [vmem:[#allocation7 + $0xa8] sm:$0xff]
    %v252 = vld [vmem:[#allocation7 + $0xb0] sm:$0xf]
    %v253 = vld [vmem:[#allocation7 + $0xb4] sm:$0xff]
    %v254 = vld [vmem:[#allocation7 + $0xbc] sm:$0xf]
    %v255 = vld [vmem:[#allocation7 + $0xc0] sm:$0xff]
    %v256 = vld [vmem:[#allocation7 + $0xc8] sm:$0xf]
    %v257 = vld [vmem:[#allocation7 + $0xcc] sm:$0xff]
    %v258 = vld [vmem:[#allocation7 + $0xd4] sm:$0xf]
    %v259 = vld [vmem:[#allocation7 + $0xd8] sm:$0xff]
    %v260 = vld [vmem:[#allocation7 + $0xe0] sm:$0xf]
    %v261 = vld [vmem:[#allocation7 + $0xe4] sm:$0xff]
    %v262 = vld [vmem:[#allocation7 + $0xec] sm:$0xf]
    %v263 = vld [vmem:[#allocation7 + $0xf0] sm:$0xff]
    %v264 = vld [vmem:[#allocation7 + $0xf8] sm:$0xf]
    %v265 = vld [vmem:[#allocation7 + $0xfc] sm:$0xff]
    %v266 = vld [vmem:[#allocation7 + $0x104] sm:$0xf]
    %v267 = vld [vmem:[#allocation7 + $0x108] sm:$0xff]
    %v268 = vld [vmem:[#allocation7 + $0x110] sm:$0xf]
    %v269 = vld [vmem:[#allocation7 + $0x114] sm:$0xff]
    %v270 = vld [vmem:[#allocation7 + $0x11c] sm:$0xf]
    %v271 = vld [vmem:[#allocation7 + $0x120] sm:$0xff]
    %v272 = vld [vmem:[#allocation7 + $0x128] sm:$0xf]
    %v273 = vld [vmem:[#allocation7 + $0x12c] sm:$0xff]
    %v274 = vld [vmem:[#allocation7 + $0x134] sm:$0xf]
    %v275 = vld [vmem:[#allocation7 + $0x138] sm:$0xff]
    %v276 = vld [vmem:[#allocation7 + $0x140] sm:$0xf]
    %v277 = vld [vmem:[#allocation7 + $0x144] sm:$0xff]
    %v278 = vld [vmem:[#allocation7 + $0x14c] sm:$0xf]
    %v279 = vld [vmem:[#allocation7 + $0x150] sm:$0xff]
    %v280 = vld [vmem:[#allocation7 + $0x158] sm:$0xf]
    %v281 = vld [vmem:[#allocation7 + $0x15c] sm:$0xff]
    %v282 = vld [vmem:[#allocation7 + $0x164] sm:$0xf]
    %v283 = vld [vmem:[#allocation7 + $0x168] sm:$0xff]
    %v284 = vld [vmem:[#allocation7 + $0x170] sm:$0xf]
    %v285 = vld [vmem:[#allocation7 + $0x174] sm:$0xff]
    %v286 = vld [vmem:[#allocation7 + $0x17c] sm:$0xf]
    %v287 = vld [vmem:[#allocation7 + $0x180] sm:$0xff]
    %v288 = vld [vmem:[#allocation7 + $0x188] sm:$0xf]
    %v289 = vld [vmem:[#allocation7 + $0x18c] sm:$0xff]
    %v290 = vld [vmem:[#allocation7 + $0x194] sm:$0xf]
    %v291 = vld [vmem:[#allocation7 + $0x198] sm:$0xff]
    %v292 = vld [vmem:[#allocation7 + $0x1a0] sm:$0xf]
    %v293 = vld [vmem:[#allocation7 + $0x1a4] sm:$0xff]
    %v294 = vld [vmem:[#allocation7 + $0x1ac] sm:$0xf]
    %v295 = vld [vmem:[#allocation7 + $0x1b0] sm:$0xff]
    %v296 = vld [vmem:[#allocation7 + $0x1b8] sm:$0xf]
    %v297 = vld [vmem:[#allocation7 + $0x1bc] sm:$0xff]
    %v298 = vld [vmem:[#allocation7 + $0x1c4] sm:$0xf]
    %v299 = vld [vmem:[#allocation7 + $0x1c8] sm:$0xff]
    %v300 = vld [vmem:[#allocation7 + $0x1d0] sm:$0xf]
    %v301 = vld [vmem:[#allocation7 + $0x1d4] sm:$0xff]
    %v302 = vld [vmem:[#allocation7 + $0x1dc] sm:$0xf]
    %v303 = vld [vmem:[#allocation7 + $0x1e0] sm:$0xff]
    %v304 = vld [vmem:[#allocation7 + $0x1e8] sm:$0xf]
    %v305 = vld [vmem:[#allocation7 + $0x1ec] sm:$0xff]
    %v306 = vld [vmem:[#allocation7 + $0x1f4] sm:$0xf]
    %v307 = vld [vmem:[#allocation7 + $0x1f8] sm:$0xff]
    %v308 = vld [vmem:[#allocation7 + $0x200] sm:$0xf]
    %v309 = vld [vmem:[#allocation7 + $0x204] sm:$0xff]
    %v310 = vld [vmem:[#allocation7 + $0x20c] sm:$0xf]
    %v311 = vld [vmem:[#allocation7 + $0x210] sm:$0xff]
    %v312 = vld [vmem:[#allocation7 + $0x218] sm:$0xf]
    %v313 = vld [vmem:[#allocation7 + $0x21c] sm:$0xff]
    %v314 = vld [vmem:[#allocation7 + $0x224] sm:$0xf]
    %v315 = vld [vmem:[#allocation7 + $0x228] sm:$0xff]
    %v316 = vld [vmem:[#allocation7 + $0x230] sm:$0xf]
    %v317 = vld [vmem:[#allocation7 + $0x234] sm:$0xff]
    %v318 = vld [vmem:[#allocation7 + $0x23c] sm:$0xf]
    %v319 = vld [vmem:[#allocation7 + $0x240] sm:$0xff]
    %v320 = vld [vmem:[#allocation7 + $0x248] sm:$0xf]
    %v321 = vld [vmem:[#allocation7 + $0x24c] sm:$0xff]
    %v322 = vld [vmem:[#allocation7 + $0x254] sm:$0xf]
    %v323 = vld [vmem:[#allocation7 + $0x258] sm:$0xff]
    %v324 = vld [vmem:[#allocation7 + $0x260] sm:$0xf]
    %v325 = vld [vmem:[#allocation7 + $0x264] sm:$0xff]
    %v326 = vld [vmem:[#allocation7 + $0x26c] sm:$0xf]
    %v327 = vld [vmem:[#allocation7 + $0x270] sm:$0xff]
    %v328 = vld [vmem:[#allocation7 + $0x278] sm:$0xf]
    %v329 = vld [vmem:[#allocation7 + $0x27c] sm:$0xff]
    %v330 = vld [vmem:[#allocation7 + $0x284] sm:$0xf]
    %v331 = vld [vmem:[#allocation7 + $0x288] sm:$0xff]
    %v332 = vld [vmem:[#allocation7 + $0x290] sm:$0xf]
    %v333 = vld [vmem:[#allocation7 + $0x294] sm:$0xff]
    %v334 = vld [vmem:[#allocation7 + $0x29c] sm:$0xf]
    %v335 = vld [vmem:[#allocation7 + $0x2a0] sm:$0xff]
    %v336 = vld [vmem:[#allocation7 + $0x2a8] sm:$0xf]
    %v337 = vld [vmem:[#allocation7 + $0x2ac] sm:$0xff]
    %v338 = vld [vmem:[#allocation7 + $0x2b4] sm:$0xf]
    %v339 = vld [vmem:[#allocation7 + $0x2b8] sm:$0xff]
    %v340 = vld [vmem:[#allocation7 + $0x2c0] sm:$0xf]
    %v341 = vld [vmem:[#allocation7 + $0x2c4] sm:$0xff]
    %v342 = vld [vmem:[#allocation7 + $0x2cc] sm:$0xf]
    %v343 = vld [vmem:[#allocation7 + $0x2d0] sm:$0xff]
    %v344 = vld [vmem:[#allocation7 + $0x2d8] sm:$0xf]
    %v345 = vld [vmem:[#allocation7 + $0x2dc] sm:$0xff]
    %v346 = vld [vmem:[#allocation7 + $0x2e4] sm:$0xf]
    %v347 = vld [vmem:[#allocation7 + $0x2e8] sm:$0xff]
    %v348 = vld [vmem:[#allocation7 + $0x2f0] sm:$0xf]
    %v349 = vld [vmem:[#allocation7 + $0x2f4] sm:$0xff]
    %v350 = vld [vmem:[#allocation7 + $0x2fc] sm:$0xf]
    %v351 = vld [vmem:[%s4] sm:$0x7]
    %v353 = vlaneseq
    %v354 = vshrl.u32 %v353, 7
    %v355 = vsub.s32 0, %v354
    %v356 = vrot.slane %v351, %v355
    %v357 = vlaneseq
    %v358 = vshrl.u32 %v357, 7
    %v359 = vsub.s32 1, %v358
    %v360 = vrot.slane %v351, %v359
    %v361 = vlaneseq
    %v362 = vshrl.u32 %v361, 7
    %v363 = vsub.s32 2, %v362
    %v364 = vrot.slane %v351, %v363
    %v496 = vunpack.c.l.b16 %v223
    %v497 = vunpack.c.h.b16 %v223
    %v498 = vunpack.c.l.b16 %v224
    %v499 = vunpack.c.l.b16 %v225
    %v500 = vunpack.c.h.b16 %v225
    %v501 = vunpack.c.l.b16 %v226
    %v502 = vunpack.c.l.b16 %v227
    %v503 = vunpack.c.h.b16 %v227
    %v504 = vunpack.c.l.b16 %v228
    %v505 = vunpack.c.l.b16 %v229
    %v506 = vunpack.c.h.b16 %v229
    %v507 = vunpack.c.l.b16 %v230
    %v508 = vunpack.c.l.b16 %v231
    %v509 = vunpack.c.h.b16 %v231
    %v510 = vunpack.c.l.b16 %v232
    %v511 = vunpack.c.l.b16 %v233
    %v512 = vunpack.c.h.b16 %v233
    %v513 = vunpack.c.l.b16 %v234
    %v514 = vunpack.c.l.b16 %v235
    %v515 = vunpack.c.h.b16 %v235
    %v516 = vunpack.c.l.b16 %v236
    %v517 = vunpack.c.l.b16 %v237
    %v518 = vunpack.c.h.b16 %v237
    %v519 = vunpack.c.l.b16 %v238
    %v520 = vunpack.c.l.b16 %v239
    %v521 = vunpack.c.h.b16 %v239
    %v522 = vunpack.c.l.b16 %v240
    %v523 = vunpack.c.l.b16 %v241
    %v524 = vunpack.c.h.b16 %v241
    %v525 = vunpack.c.l.b16 %v242
    %v526 = vunpack.c.l.b16 %v243
    %v527 = vunpack.c.h.b16 %v243
    %v528 = vunpack.c.l.b16 %v244
    %v529 = vunpack.c.l.b16 %v245
    %v530 = vunpack.c.h.b16 %v245
    %v531 = vunpack.c.l.b16 %v246
    %v532 = vunpack.c.l.b16 %v247
    %v533 = vunpack.c.h.b16 %v247
    %v534 = vunpack.c.l.b16 %v248
    %v535 = vunpack.c.l.b16 %v249
    %v536 = vunpack.c.h.b16 %v249
    %v537 = vunpack.c.l.b16 %v250
    %v538 = vunpack.c.l.b16 %v251
    %v539 = vunpack.c.h.b16 %v251
    %v540 = vunpack.c.l.b16 %v252
    %v541 = vunpack.c.l.b16 %v253
    %v542 = vunpack.c.h.b16 %v253
    %v543 = vunpack.c.l.b16 %v254
    %v544 = vunpack.c.l.b16 %v255
    %v545 = vunpack.c.h.b16 %v255
    %v546 = vunpack.c.l.b16 %v256
    %v547 = vunpack.c.l.b16 %v257
    %v548 = vunpack.c.h.b16 %v257
    %v549 = vunpack.c.l.b16 %v258
    %v550 = vunpack.c.l.b16 %v259
    %v551 = vunpack.c.h.b16 %v259
    %v552 = vunpack.c.l.b16 %v260
    %v553 = vunpack.c.l.b16 %v261
    %v554 = vunpack.c.h.b16 %v261
    %v555 = vunpack.c.l.b16 %v262
    %v556 = vunpack.c.l.b16 %v263
    %v557 = vunpack.c.h.b16 %v263
    %v558 = vunpack.c.l.b16 %v264
    %v559 = vunpack.c.l.b16 %v265
    %v560 = vunpack.c.h.b16 %v265
    %v561 = vunpack.c.l.b16 %v266
    %v562 = vunpack.c.l.b16 %v267
    %v563 = vunpack.c.h.b16 %v267
    %v564 = vunpack.c.l.b16 %v268
    %v565 = vunpack.c.l.b16 %v269
    %v566 = vunpack.c.h.b16 %v269
    %v567 = vunpack.c.l.b16 %v270
    %v568 = vunpack.c.l.b16 %v271
    %v569 = vunpack.c.h.b16 %v271
    %v570 = vunpack.c.l.b16 %v272
    %v571 = vunpack.c.l.b16 %v273
    %v572 = vunpack.c.h.b16 %v273
    %v573 = vunpack.c.l.b16 %v274
    %v574 = vunpack.c.l.b16 %v275
    %v575 = vunpack.c.h.b16 %v275
    %v576 = vunpack.c.l.b16 %v276
    %v577 = vunpack.c.l.b16 %v277
    %v578 = vunpack.c.h.b16 %v277
    %v579 = vunpack.c.l.b16 %v278
    %v580 = vunpack.c.l.b16 %v279
    %v581 = vunpack.c.h.b16 %v279
    %v582 = vunpack.c.l.b16 %v280
    %v583 = vunpack.c.l.b16 %v281
    %v584 = vunpack.c.h.b16 %v281
    %v585 = vunpack.c.l.b16 %v282
    %v586 = vunpack.c.l.b16 %v283
    %v587 = vunpack.c.h.b16 %v283
    %v588 = vunpack.c.l.b16 %v284
    %v589 = vunpack.c.l.b16 %v285
    %v590 = vunpack.c.h.b16 %v285
    %v591 = vunpack.c.l.b16 %v286
    %v592 = vunpack.c.l.b16 %v287
    %v593 = vunpack.c.h.b16 %v287
    %v594 = vunpack.c.l.b16 %v288
    %v595 = vunpack.c.l.b16 %v289
    %v596 = vunpack.c.h.b16 %v289
    %v597 = vunpack.c.l.b16 %v290
    %v598 = vunpack.c.l.b16 %v291
    %v599 = vunpack.c.h.b16 %v291
    %v600 = vunpack.c.l.b16 %v292
    %v601 = vunpack.c.l.b16 %v293
    %v602 = vunpack.c.h.b16 %v293
    %v603 = vunpack.c.l.b16 %v294
    %v604 = vunpack.c.l.b16 %v295
    %v605 = vunpack.c.h.b16 %v295
    %v606 = vunpack.c.l.b16 %v296
    %v607 = vunpack.c.l.b16 %v297
    %v608 = vunpack.c.h.b16 %v297
    %v609 = vunpack.c.l.b16 %v298
    %v610 = vunpack.c.l.b16 %v299
    %v611 = vunpack.c.h.b16 %v299
    %v612 = vunpack.c.l.b16 %v300
    %v613 = vunpack.c.l.b16 %v301
    %v614 = vunpack.c.h.b16 %v301
    %v615 = vunpack.c.l.b16 %v302
    %v616 = vunpack.c.l.b16 %v303
    %v617 = vunpack.c.h.b16 %v303
    %v618 = vunpack.c.l.b16 %v304
    %v619 = vunpack.c.l.b16 %v305
    %v620 = vunpack.c.h.b16 %v305
    %v621 = vunpack.c.l.b16 %v306
    %v622 = vunpack.c.l.b16 %v307
    %v623 = vunpack.c.h.b16 %v307
    %v624 = vunpack.c.l.b16 %v308
    %v625 = vunpack.c.l.b16 %v309
    %v626 = vunpack.c.h.b16 %v309
    %v627 = vunpack.c.l.b16 %v310
    %v628 = vunpack.c.l.b16 %v311
    %v629 = vunpack.c.h.b16 %v311
    %v630 = vunpack.c.l.b16 %v312
    %v631 = vunpack.c.l.b16 %v313
    %v632 = vunpack.c.h.b16 %v313
    %v633 = vunpack.c.l.b16 %v314
    %v634 = vunpack.c.l.b16 %v315
    %v635 = vunpack.c.h.b16 %v315
    %v636 = vunpack.c.l.b16 %v316
    %v637 = vunpack.c.l.b16 %v317
    %v638 = vunpack.c.h.b16 %v317
    %v639 = vunpack.c.l.b16 %v318
    %v640 = vunpack.c.l.b16 %v319
    %v641 = vunpack.c.h.b16 %v319
    %v642 = vunpack.c.l.b16 %v320
    %v643 = vunpack.c.l.b16 %v321
    %v644 = vunpack.c.h.b16 %v321
    %v645 = vunpack.c.l.b16 %v322
    %v646 = vunpack.c.l.b16 %v323
    %v647 = vunpack.c.h.b16 %v323
    %v648 = vunpack.c.l.b16 %v324
    %v649 = vunpack.c.l.b16 %v325
    %v650 = vunpack.c.h.b16 %v325
    %v651 = vunpack.c.l.b16 %v326
    %v652 = vunpack.c.l.b16 %v327
    %v653 = vunpack.c.h.b16 %v327
    %v654 = vunpack.c.l.b16 %v328
    %v655 = vunpack.c.l.b16 %v329
    %v656 = vunpack.c.h.b16 %v329
    %v657 = vunpack.c.l.b16 %v330
    %v658 = vunpack.c.l.b16 %v331
    %v659 = vunpack.c.h.b16 %v331
    %v660 = vunpack.c.l.b16 %v332
    %v661 = vunpack.c.l.b16 %v333
    %v662 = vunpack.c.h.b16 %v333
    %v663 = vunpack.c.l.b16 %v334
    %v664 = vunpack.c.l.b16 %v335
    %v665 = vunpack.c.h.b16 %v335
    %v666 = vunpack.c.l.b16 %v336
    %v667 = vunpack.c.l.b16 %v337
    %v668 = vunpack.c.h.b16 %v337
    %v669 = vunpack.c.l.b16 %v338
    %v670 = vunpack.c.l.b16 %v339
    %v671 = vunpack.c.h.b16 %v339
    %v672 = vunpack.c.l.b16 %v340
    %v673 = vunpack.c.l.b16 %v341
    %v674 = vunpack.c.h.b16 %v341
    %v675 = vunpack.c.l.b16 %v342
    %v676 = vunpack.c.l.b16 %v343
    %v677 = vunpack.c.h.b16 %v343
    %v678 = vunpack.c.l.b16 %v344
    %v679 = vunpack.c.l.b16 %v345
    %v680 = vunpack.c.h.b16 %v345
    %v681 = vunpack.c.l.b16 %v346
    %v682 = vunpack.c.l.b16 %v347
    %v683 = vunpack.c.h.b16 %v347
    %v684 = vunpack.c.l.b16 %v348
    %v685 = vunpack.c.l.b16 %v349
    %v686 = vunpack.c.h.b16 %v349
    %v687 = vunpack.c.l.b16 %v350
    %v688 = vpack.c.b16 %v499, %v496
    %v689 = vpack.c.b16 %v500, %v497
    %v690 = vpack.c.b16 %v501, %v498
    %v691 = vpack.c.b16 %v505, %v502
    %v692 = vpack.c.b16 %v506, %v503
    %v693 = vpack.c.b16 %v507, %v504
    %v694 = vpack.c.b16 %v511, %v508
    %v695 = vpack.c.b16 %v512, %v509
    %v696 = vpack.c.b16 %v513, %v510
    %v697 = vpack.c.b16 %v517, %v514
    %v698 = vpack.c.b16 %v518, %v515
    %v699 = vpack.c.b16 %v519, %v516
    %v700 = vpack.c.b16 %v523, %v520
    %v701 = vpack.c.b16 %v524, %v521
    %v702 = vpack.c.b16 %v525, %v522
    %v703 = vpack.c.b16 %v529, %v526
    %v704 = vpack.c.b16 %v530, %v527
    %v705 = vpack.c.b16 %v531, %v528
    %v706 = vpack.c.b16 %v535, %v532
    %v707 = vpack.c.b16 %v536, %v533
    %v708 = vpack.c.b16 %v537, %v534
    %v709 = vpack.c.b16 %v541, %v538
    %v710 = vpack.c.b16 %v542, %v539
    %v711 = vpack.c.b16 %v543, %v540
    %v712 = vpack.c.b16 %v547, %v544
    %v713 = vpack.c.b16 %v548, %v545
    %v714 = vpack.c.b16 %v549, %v546
    %v715 = vpack.c.b16 %v553, %v550
    %v716 = vpack.c.b16 %v554, %v551
    %v717 = vpack.c.b16 %v555, %v552
    %v718 = vpack.c.b16 %v559, %v556
    %v719 = vpack.c.b16 %v560, %v557
    %v720 = vpack.c.b16 %v561, %v558
    %v721 = vpack.c.b16 %v565, %v562
    %v722 = vpack.c.b16 %v566, %v563
    %v723 = vpack.c.b16 %v567, %v564
    %v724 = vpack.c.b16 %v571, %v568
    %v725 = vpack.c.b16 %v572, %v569
    %v726 = vpack.c.b16 %v573, %v570
    %v727 = vpack.c.b16 %v577, %v574
    %v728 = vpack.c.b16 %v578, %v575
    %v729 = vpack.c.b16 %v579, %v576
    %v730 = vpack.c.b16 %v583, %v580
    %v731 = vpack.c.b16 %v584, %v581
    %v732 = vpack.c.b16 %v585, %v582
    %v733 = vpack.c.b16 %v589, %v586
    %v734 = vpack.c.b16 %v590, %v587
    %v735 = vpack.c.b16 %v591, %v588
    %v736 = vpack.c.b16 %v595, %v592
    %v737 = vpack.c.b16 %v596, %v593
    %v738 = vpack.c.b16 %v597, %v594
    %v739 = vpack.c.b16 %v601, %v598
    %v740 = vpack.c.b16 %v602, %v599
    %v741 = vpack.c.b16 %v603, %v600
    %v742 = vpack.c.b16 %v607, %v604
    %v743 = vpack.c.b16 %v608, %v605
    %v744 = vpack.c.b16 %v609, %v606
    %v745 = vpack.c.b16 %v613, %v610
    %v746 = vpack.c.b16 %v614, %v611
    %v747 = vpack.c.b16 %v615, %v612
    %v748 = vpack.c.b16 %v619, %v616
    %v749 = vpack.c.b16 %v620, %v617
    %v750 = vpack.c.b16 %v621, %v618
    %v751 = vpack.c.b16 %v625, %v622
    %v752 = vpack.c.b16 %v626, %v623
    %v753 = vpack.c.b16 %v627, %v624
    %v754 = vpack.c.b16 %v631, %v628
    %v755 = vpack.c.b16 %v632, %v629
    %v756 = vpack.c.b16 %v633, %v630
    %v757 = vpack.c.b16 %v637, %v634
    %v758 = vpack.c.b16 %v638, %v635
    %v759 = vpack.c.b16 %v639, %v636
    %v760 = vpack.c.b16 %v643, %v640
    %v761 = vpack.c.b16 %v644, %v641
    %v762 = vpack.c.b16 %v645, %v642
    %v763 = vpack.c.b16 %v649, %v646
    %v764 = vpack.c.b16 %v650, %v647
    %v765 = vpack.c.b16 %v651, %v648
    %v766 = vpack.c.b16 %v655, %v652
    %v767 = vpack.c.b16 %v656, %v653
    %v768 = vpack.c.b16 %v657, %v654
    %v769 = vpack.c.b16 %v661, %v658
    %v770 = vpack.c.b16 %v662, %v659
    %v771 = vpack.c.b16 %v663, %v660
    %v772 = vpack.c.b16 %v667, %v664
    %v773 = vpack.c.b16 %v668, %v665
    %v774 = vpack.c.b16 %v669, %v666
    %v775 = vpack.c.b16 %v673, %v670
    %v776 = vpack.c.b16 %v674, %v671
    %v777 = vpack.c.b16 %v675, %v672
    %v778 = vpack.c.b16 %v679, %v676
    %v779 = vpack.c.b16 %v680, %v677
    %v780 = vpack.c.b16 %v681, %v678
    %v781 = vpack.c.b16 %v685, %v682
    %v782 = vpack.c.b16 %v686, %v683
    %v783 = vpack.c.b16 %v687, %v684
    %880 = vmatprep.subr.bf16.mxu0 %v689
    %881 = vmatpush1.bf16.msra.mxu0 %v688
    %882 = vmatprep.subr.bf16.mxu0 %v692
    %883 = vmatpush1.bf16.msra.mxu0 %v691
    %884 = vmatprep.subr.bf16.mxu0 %v695
    %885 = vmatpush1.bf16.msra.mxu0 %v694
    %886 = vmatprep.subr.bf16.mxu0 %v698
    %887 = vmatpush1.bf16.msra.mxu0 %v697
    %888 = vmatprep.subr.bf16.mxu0 %v701
    %889 = vmatpush1.bf16.msra.mxu0 %v700
    %890 = vmatprep.subr.bf16.mxu0 %v704
    %891 = vmatpush1.bf16.msra.mxu0 %v703
    %892 = vmatprep.subr.bf16.mxu0 %v707
    %893 = vmatpush1.bf16.msra.mxu0 %v706
    %894 = vmatprep.subr.bf16.mxu0 %v710
    %895 = vmatpush1.bf16.msra.mxu0 %v709
    %896 = vmatprep.subr.bf16.mxu0 %v713
    %897 = vmatpush1.bf16.msra.mxu0 %v712
    %898 = vmatprep.subr.bf16.mxu0 %v716
    %899 = vmatpush1.bf16.msra.mxu0 %v715
    %900 = vmatprep.subr.bf16.mxu0 %v719
    %901 = vmatpush1.bf16.msra.mxu0 %v718
    %902 = vmatprep.subr.bf16.mxu0 %v722
    %903 = vmatpush1.bf16.msra.mxu0 %v721
    %904 = vmatprep.subr.bf16.mxu0 %v725
    %905 = vmatpush1.bf16.msra.mxu0 %v724
    %906 = vmatprep.subr.bf16.mxu0 %v728
    %907 = vmatpush1.bf16.msra.mxu0 %v727
    %908 = vmatprep.subr.bf16.mxu0 %v731
    %909 = vmatpush1.bf16.msra.mxu0 %v730
    %910 = vmatprep.subr.bf16.mxu0 %v734
    %911 = vmatpush1.bf16.msra.mxu0 %v733
    %912 = vmatprep.mubr.bf16.mxu0 %v220
    %913 = vmatmul.mubr.bf16.gmra.mrb[0].mxu0 %v219
    %v914 = vpop.f32.mrb[0].mxu0
    %v915 = vadd.f32 %v356, %v914
    %v916 = vpop.f32.mrb[0].mxu0
    %v917 = vadd.f32 %v360, %v916
    %v918 = vpop.f32.mrb[0].mxu0
    %v919 = vpop.f32.mrb[0].mxu0
    %920 = vdwg.mxu0
    %921 = vmatprep.subr.bf16.mxu0 %v737
    %922 = vmatpush1.bf16.msra.mxu0 %v736
    %923 = vmatprep.subr.bf16.mxu0 %v740
    %924 = vmatpush1.bf16.msra.mxu0 %v739
    %925 = vmatprep.subr.bf16.mxu0 %v743
    %926 = vmatpush1.bf16.msra.mxu0 %v742
    %927 = vmatprep.subr.bf16.mxu0 %v746
    %928 = vmatpush1.bf16.msra.mxu0 %v745
    %929 = vmatprep.subr.bf16.mxu0 %v749
    %930 = vmatpush1.bf16.msra.mxu0 %v748
    %931 = vmatprep.subr.bf16.mxu0 %v752
    %932 = vmatpush1.bf16.msra.mxu0 %v751
    %933 = vmatprep.subr.bf16.mxu0 %v755
    %934 = vmatpush1.bf16.msra.mxu0 %v754
    %935 = vmatprep.subr.bf16.mxu0 %v758
    %936 = vmatpush1.bf16.msra.mxu0 %v757
    %937 = vmatprep.subr.bf16.mxu0 %v761
    %938 = vmatpush1.bf16.msra.mxu0 %v760
    %939 = vmatprep.subr.bf16.mxu0 %v764
    %940 = vmatpush1.bf16.msra.mxu0 %v763
    %941 = vmatprep.subr.bf16.mxu0 %v767
    %942 = vmatpush1.bf16.msra.mxu0 %v766
    %943 = vmatprep.subr.bf16.mxu0 %v770
    %944 = vmatpush1.bf16.msra.mxu0 %v769
    %945 = vmatprep.subr.bf16.mxu0 %v773
    %946 = vmatpush1.bf16.msra.mxu0 %v772
    %947 = vmatprep.subr.bf16.mxu0 %v776
    %948 = vmatpush1.bf16.msra.mxu0 %v775
    %949 = vmatprep.subr.bf16.mxu0 %v779
    %950 = vmatpush1.bf16.msra.mxu0 %v778
    %951 = vmatprep.subr.bf16.mxu0 %v782
    %952 = vmatpush1.bf16.msra.mxu0 %v781
    %953 = vmatprep.mubr.bf16.mxu0 %v222
    %954 = vmatmul.mubr.bf16.gmra.mrb[0].mxu0 %v221
    %v955 = vpop.f32.mrb[0].mxu0
    %v956 = vadd.f32 %v915, %v955
    %v957 = vpop.f32.mrb[0].mxu0
    %v958 = vadd.f32 %v917, %v957
    %v959 = vpop.f32.mrb[0].mxu0
    %v960 = vpop.f32.mrb[0].mxu0
    %961 = vdwg.mxu0
    %962 = vmatprep.subr.bf16.mxu0 0
    %963 = vmatpush1.bf16.msra.mxu0 %v690
    %964 = vmatprep.subr.bf16.mxu0 0
    %965 = vmatpush1.bf16.msra.mxu0 %v693
    %966 = vmatprep.subr.bf16.mxu0 0
    %967 = vmatpush1.bf16.msra.mxu0 %v696
    %968 = vmatprep.subr.bf16.mxu0 0
    %969 = vmatpush1.bf16.msra.mxu0 %v699
    %970 = vmatprep.subr.bf16.mxu0 0
    %971 = vmatpush1.bf16.msra.mxu0 %v702
    %972 = vmatprep.subr.bf16.mxu0 0
    %973 = vmatpush1.bf16.msra.mxu0 %v705
    %974 = vmatprep.subr.bf16.mxu0 0
    %975 = vmatpush1.bf16.msra.mxu0 %v708
    %976 = vmatprep.subr.bf16.mxu0 0
    %977 = vmatpush1.bf16.msra.mxu0 %v711
    %978 = vmatprep.subr.bf16.mxu0 0
    %979 = vmatpush1.bf16.msra.mxu0 %v714
    %980 = vmatprep.subr.bf16.mxu0 0
    %981 = vmatpush1.bf16.msra.mxu0 %v717
    %982 = vmatprep.subr.bf16.mxu0 0
    %983 = vmatpush1.bf16.msra.mxu0 %v720
    %984 = vmatprep.subr.bf16.mxu0 0
    %985 = vmatpush1.bf16.msra.mxu0 %v723
    %986 = vmatprep.subr.bf16.mxu0 0
    %987 = vmatpush1.bf16.msra.mxu0 %v726
    %988 = vmatprep.subr.bf16.mxu0 0
    %989 = vmatpush1.bf16.msra.mxu0 %v729
    %990 = vmatprep.subr.bf16.mxu0 0
    %991 = vmatpush1.bf16.msra.mxu0 %v732
    %992 = vmatprep.subr.bf16.mxu0 0
    %993 = vmatpush1.bf16.msra.mxu0 %v735
    %994 = vmatprep.mubr.bf16.mxu0 %v220
    %995 = vmatmul.mubr.bf16.gmra.mrb[0].mxu0 %v219
    %v996 = vpop.f32.mrb[0].mxu0
    %v997 = vadd.f32 %v364, %v996
    %v998 = vpop.f32.mrb[0].mxu0
    %v999 = vpop.f32.mrb[0].mxu0
    %v1000 = vpop.f32.mrb[0].mxu0
    %1001 = vdwg.mxu0
    %1002 = vmatprep.subr.bf16.mxu0 0
    %1003 = vmatpush1.bf16.msra.mxu0 %v738
    %1004 = vmatprep.subr.bf16.mxu0 0
    %1005 = vmatpush1.bf16.msra.mxu0 %v741
    %1006 = vmatprep.subr.bf16.mxu0 0
    %1007 = vmatpush1.bf16.msra.mxu0 %v744
    %1008 = vmatprep.subr.bf16.mxu0 0
    %1009 = vmatpush1.bf16.msra.mxu0 %v747
    %1010 = vmatprep.subr.bf16.mxu0 0
    %1011 = vmatpush1.bf16.msra.mxu0 %v750
    %1012 = vmatprep.subr.bf16.mxu0 0
    %1013 = vmatpush1.bf16.msra.mxu0 %v753
    %1014 = vmatprep.subr.bf16.mxu0 0
    %1015 = vmatpush1.bf16.msra.mxu0 %v756
    %1016 = vmatprep.subr.bf16.mxu0 0
    %1017 = vmatpush1.bf16.msra.mxu0 %v759
    %1018 = vmatprep.subr.bf16.mxu0 0
    %1019 = vmatpush1.bf16.msra.mxu0 %v762
    %1020 = vmatprep.subr.bf16.mxu0 0
    %1021 = vmatpush1.bf16.msra.mxu0 %v765
    %1022 = vmatprep.subr.bf16.mxu0 0
    %1023 = vmatpush1.bf16.msra.mxu0 %v768
    %1024 = vmatprep.subr.bf16.mxu0 0
    %1025 = vmatpush1.bf16.msra.mxu0 %v771
    %1026 = vmatprep.subr.bf16.mxu0 0
    %1027 = vmatpush1.bf16.msra.mxu0 %v774
    %1028 = vmatprep.subr.bf16.mxu0 0
    %1029 = vmatpush1.bf16.msra.mxu0 %v777
    %1030 = vmatprep.subr.bf16.mxu0 0
    %1031 = vmatpush1.bf16.msra.mxu0 %v780
    %1032 = vmatprep.subr.bf16.mxu0 0
    %1033 = vmatpush1.bf16.msra.mxu0 %v783
    %1034 = vmatprep.mubr.bf16.mxu0 %v222
    %1035 = vmatmul.mubr.bf16.gmra.mrb[0].mxu0 %v221
    %v1036 = vpop.f32.mrb[0].mxu0
    %v1037 = vadd.f32 %v997, %v1036
    %v1038 = vpop.f32.mrb[0].mxu0
    %v1039 = vpop.f32.mrb[0].mxu0
    %v1040 = vpop.f32.mrb[0].mxu0
    %1041 = vdwg.mxu0
    %v1042 = vmax.f32 %v956, 0.0
    %v1043 = vmax.f32 %v958, 0.0
    %v1044 = vmax.f32 %v1037, 0.0
    %v1045 = vpack.c.bf16 %v1042, %v1042
    %v1046 = vpack.c.bf16 %v1043, %v1043
    %v1047 = vpack.c.bf16 %v1044, %v1044
    %v1048 = vld [vmem:[#allocation8] sm:$0xf]
    %v1049 = vld [vmem:[#allocation8 + $0x4] sm:$0xf]
    %v1050 = vld [vmem:[#allocation8 + $0x8] sm:$0xf]
    %v1051 = vld [vmem:[#allocation8 + $0xc] sm:$0xf]
    %v1052 = vld [vmem:[#allocation8 + $0x10] sm:$0xf]
    %v1053 = vld [vmem:[#allocation8 + $0x14] sm:$0xf]
    %v1054 = vld [vmem:[#allocation8 + $0x18] sm:$0xf]
    %v1055 = vld [vmem:[#allocation8 + $0x1c] sm:$0xf]
    %v1056 = vld [vmem:[#allocation8 + $0x20] sm:$0xf]
    %v1057 = vld [vmem:[#allocation8 + $0x24] sm:$0xf]
    %v1058 = vld [vmem:[#allocation8 + $0x28] sm:$0xf]
    %v1059 = vld [vmem:[#allocation8 + $0x2c] sm:$0xf]
    %v1060 = vld [vmem:[#allocation8 + $0x30] sm:$0xf]
    %v1061 = vld [vmem:[#allocation8 + $0x34] sm:$0xf]
    %v1062 = vld [vmem:[#allocation8 + $0x38] sm:$0xf]
    %v1063 = vld [vmem:[#allocation8 + $0x3c] sm:$0xf]
    %v1064 = vld [vmem:[#allocation8 + $0x40] sm:$0xf]
    %v1065 = vld [vmem:[#allocation8 + $0x44] sm:$0xf]
    %v1066 = vld [vmem:[#allocation8 + $0x48] sm:$0xf]
    %v1067 = vld [vmem:[#allocation8 + $0x4c] sm:$0xf]
    %v1068 = vld [vmem:[#allocation8 + $0x50] sm:$0xf]
    %v1069 = vld [vmem:[#allocation8 + $0x54] sm:$0xf]
    %v1070 = vld [vmem:[#allocation8 + $0x58] sm:$0xf]
    %v1071 = vld [vmem:[#allocation8 + $0x5c] sm:$0xf]
    %v1072 = vld [vmem:[#allocation8 + $0x60] sm:$0xf]
    %v1073 = vld [vmem:[#allocation8 + $0x64] sm:$0xf]
    %v1074 = vld [vmem:[#allocation8 + $0x68] sm:$0xf]
    %v1075 = vld [vmem:[#allocation8 + $0x6c] sm:$0xf]
    %v1076 = vld [vmem:[#allocation8 + $0x70] sm:$0xf]
    %v1077 = vld [vmem:[#allocation8 + $0x74] sm:$0xf]
    %v1078 = vld [vmem:[#allocation8 + $0x78] sm:$0xf]
    %v1079 = vld [vmem:[#allocation8 + $0x7c] sm:$0xf]
    %v1080 = vld [vmem:[#allocation8 + $0x80] sm:$0xf]
    %v1081 = vld [vmem:[#allocation8 + $0x84] sm:$0xf]
    %v1082 = vld [vmem:[#allocation8 + $0x88] sm:$0xf]
    %v1083 = vld [vmem:[#allocation8 + $0x8c] sm:$0xf]
    %v1084 = vld [vmem:[#allocation8 + $0x90] sm:$0xf]
    %v1085 = vld [vmem:[#allocation8 + $0x94] sm:$0xf]
    %v1086 = vld [vmem:[#allocation8 + $0x98] sm:$0xf]
    %v1087 = vld [vmem:[#allocation8 + $0x9c] sm:$0xf]
    %v1088 = vld [vmem:[#allocation8 + $0xa0] sm:$0xf]
    %v1089 = vld [vmem:[#allocation8 + $0xa4] sm:$0xf]
    %v1090 = vld [vmem:[#allocation8 + $0xa8] sm:$0xf]
    %v1091 = vld [vmem:[#allocation8 + $0xac] sm:$0xf]
    %v1092 = vld [vmem:[#allocation8 + $0xb0] sm:$0xf]
    %v1093 = vld [vmem:[#allocation8 + $0xb4] sm:$0xf]
    %v1094 = vld [vmem:[#allocation8 + $0xb8] sm:$0xf]
    %v1095 = vld [vmem:[#allocation8 + $0xbc] sm:$0xf]
    %v1096 = vld [vmem:[%s6] sm:$0x1]
    %v1098 = vlaneseq
    %v1099 = vshrl.u32 %v1098, 7
    %v1100 = vsub.s32 0, %v1099
    %v1101 = vrot.slane %v1096, %v1100
    %v1151 = vunpack.c.l.b16 %v1048
    %v1152 = vunpack.c.l.b16 %v1049
    %v1153 = vunpack.c.l.b16 %v1050
    %v1154 = vunpack.c.l.b16 %v1051
    %v1155 = vunpack.c.l.b16 %v1052
    %v1156 = vunpack.c.l.b16 %v1053
    %v1157 = vunpack.c.l.b16 %v1054
    %v1158 = vunpack.c.l.b16 %v1055
    %v1159 = vunpack.c.l.b16 %v1056
    %v1160 = vunpack.c.l.b16 %v1057
    %v1161 = vunpack.c.l.b16 %v1058
    %v1162 = vunpack.c.l.b16 %v1059
    %v1163 = vunpack.c.l.b16 %v1060
    %v1164 = vunpack.c.l.b16 %v1061
    %v1165 = vunpack.c.l.b16 %v1062
    %v1166 = vunpack.c.l.b16 %v1063
    %v1167 = vunpack.c.l.b16 %v1064
    %v1168 = vunpack.c.l.b16 %v1065
    %v1169 = vunpack.c.l.b16 %v1066
    %v1170 = vunpack.c.l.b16 %v1067
    %v1171 = vunpack.c.l.b16 %v1068
    %v1172 = vunpack.c.l.b16 %v1069
    %v1173 = vunpack.c.l.b16 %v1070
    %v1174 = vunpack.c.l.b16 %v1071
    %v1175 = vunpack.c.l.b16 %v1072
    %v1176 = vunpack.c.l.b16 %v1073
    %v1177 = vunpack.c.l.b16 %v1074
    %v1178 = vunpack.c.l.b16 %v1075
    %v1179 = vunpack.c.l.b16 %v1076
    %v1180 = vunpack.c.l.b16 %v1077
    %v1181 = vunpack.c.l.b16 %v1078
    %v1182 = vunpack.c.l.b16 %v1079
    %v1183 = vunpack.c.l.b16 %v1080
    %v1184 = vunpack.c.l.b16 %v1081
    %v1185 = vunpack.c.l.b16 %v1082
    %v1186 = vunpack.c.l.b16 %v1083
    %v1187 = vunpack.c.l.b16 %v1084
    %v1188 = vunpack.c.l.b16 %v1085
    %v1189 = vunpack.c.l.b16 %v1086
    %v1190 = vunpack.c.l.b16 %v1087
    %v1191 = vunpack.c.l.b16 %v1088
    %v1192 = vunpack.c.l.b16 %v1089
    %v1193 = vunpack.c.l.b16 %v1090
    %v1194 = vunpack.c.l.b16 %v1091
    %v1195 = vunpack.c.l.b16 %v1092
    %v1196 = vunpack.c.l.b16 %v1093
    %v1197 = vunpack.c.l.b16 %v1094
    %v1198 = vunpack.c.l.b16 %v1095
    %v1199 = vpack.c.b16 %v1152, %v1151
    %v1200 = vpack.c.b16 %v1154, %v1153
    %v1201 = vpack.c.b16 %v1156, %v1155
    %v1202 = vpack.c.b16 %v1158, %v1157
    %v1203 = vpack.c.b16 %v1160, %v1159
    %v1204 = vpack.c.b16 %v1162, %v1161
    %v1205 = vpack.c.b16 %v1164, %v1163
    %v1206 = vpack.c.b16 %v1166, %v1165
    %v1207 = vpack.c.b16 %v1168, %v1167
    %v1208 = vpack.c.b16 %v1170, %v1169
    %v1209 = vpack.c.b16 %v1172, %v1171
    %v1210 = vpack.c.b16 %v1174, %v1173
    %v1211 = vpack.c.b16 %v1176, %v1175
    %v1212 = vpack.c.b16 %v1178, %v1177
    %v1213 = vpack.c.b16 %v1180, %v1179
    %v1214 = vpack.c.b16 %v1182, %v1181
    %v1215 = vpack.c.b16 %v1184, %v1183
    %v1216 = vpack.c.b16 %v1186, %v1185
    %v1217 = vpack.c.b16 %v1188, %v1187
    %v1218 = vpack.c.b16 %v1190, %v1189
    %v1219 = vpack.c.b16 %v1192, %v1191
    %v1220 = vpack.c.b16 %v1194, %v1193
    %v1221 = vpack.c.b16 %v1196, %v1195
    %v1222 = vpack.c.b16 %v1198, %v1197
    %1247 = vmatprep.subr.bf16.mxu0 0
    %1248 = vmatpush1.bf16.msra.mxu0 %v1199
    %1249 = vmatprep.subr.bf16.mxu0 0
    %1250 = vmatpush1.bf16.msra.mxu0 %v1200
    %1251 = vmatprep.subr.bf16.mxu0 0
    %1252 = vmatpush1.bf16.msra.mxu0 %v1201
    %1253 = vmatprep.subr.bf16.mxu0 0
    %1254 = vmatpush1.bf16.msra.mxu0 %v1202
    %1255 = vmatprep.subr.bf16.mxu0 0
    %1256 = vmatpush1.bf16.msra.mxu0 %v1203
    %1257 = vmatprep.subr.bf16.mxu0 0
    %1258 = vmatpush1.bf16.msra.mxu0 %v1204
    %1259 = vmatprep.subr.bf16.mxu0 0
    %1260 = vmatpush1.bf16.msra.mxu0 %v1205
    %1261 = vmatprep.subr.bf16.mxu0 0
    %1262 = vmatpush1.bf16.msra.mxu0 %v1206
    %1263 = vmatprep.subr.bf16.mxu0 0
    %1264 = vmatpush1.bf16.msra.mxu0 %v1207
    %1265 = vmatprep.subr.bf16.mxu0 0
    %1266 = vmatpush1.bf16.msra.mxu0 %v1208
    %1267 = vmatprep.subr.bf16.mxu0 0
    %1268 = vmatpush1.bf16.msra.mxu0 %v1209
    %1269 = vmatprep.subr.bf16.mxu0 0
    %1270 = vmatpush1.bf16.msra.mxu0 %v1210
    %1271 = vmatprep.subr.bf16.mxu0 0
    %1272 = vmatpush1.bf16.msra.mxu0 %v1211
    %1273 = vmatprep.subr.bf16.mxu0 0
    %1274 = vmatpush1.bf16.msra.mxu0 %v1212
    %1275 = vmatprep.subr.bf16.mxu0 0
    %1276 = vmatpush1.bf16.msra.mxu0 %v1213
    %1277 = vmatprep.subr.bf16.mxu0 0
    %1278 = vmatpush1.bf16.msra.mxu0 %v1214
    %1279 = vmatprep.mubr.bf16.mxu0 %v1046
    %1280 = vmatmul.mubr.bf16.gmra.mrb[0].mxu0 %v1045
    %v1281 = vpop.f32.mrb[0].mxu0
    %v1282 = vadd.f32 %v1101, %v1281
    %v1283 = vpop.f32.mrb[0].mxu0
    %v1284 = vpop.f32.mrb[0].mxu0
    %v1285 = vpop.f32.mrb[0].mxu0
    %1286 = vdwg.mxu0
    %1287 = vmatprep.subr.bf16.mxu0 0
    %1288 = vmatpush1.bf16.msra.mxu0 %v1215
    %1289 = vmatprep.subr.bf16.mxu0 0
    %1290 = vmatpush1.bf16.msra.mxu0 %v1216
    %1291 = vmatprep.subr.bf16.mxu0 0
    %1292 = vmatpush1.bf16.msra.mxu0 %v1217
    %1293 = vmatprep.subr.bf16.mxu0 0
    %1294 = vmatpush1.bf16.msra.mxu0 %v1218
    %1295 = vmatprep.subr.bf16.mxu0 0
    %1296 = vmatpush1.bf16.msra.mxu0 %v1219
    %1297 = vmatprep.subr.bf16.mxu0 0
    %1298 = vmatpush1.bf16.msra.mxu0 %v1220
    %1299 = vmatprep.subr.bf16.mxu0 0
    %1300 = vmatpush1.bf16.msra.mxu0 %v1221
    %1301 = vmatprep.subr.bf16.mxu0 0
    %1302 = vmatpush1.bf16.msra.mxu0 %v1222
    %1303 = vmatprep.subr.bf16.mxu0 0
    %1304 = vmatpush1.bf16.msra.mxu0 0
    %1305 = vmatprep.subr.bf16.mxu0 0
    %1306 = vmatpush1.bf16.msra.mxu0 0
    %1307 = vmatprep.subr.bf16.mxu0 0
    %1308 = vmatpush1.bf16.msra.mxu0 0
    %1309 = vmatprep.subr.bf16.mxu0 0
    %1310 = vmatpush1.bf16.msra.mxu0 0
    %1311 = vmatprep.subr.bf16.mxu0 0
    %1312 = vmatpush1.bf16.msra.mxu0 0
    %1313 = vmatprep.subr.bf16.mxu0 0
    %1314 = vmatpush1.bf16.msra.mxu0 0
    %1315 = vmatprep.subr.bf16.mxu0 0
    %1316 = vmatpush1.bf16.msra.mxu0 0
    %1317 = vmatprep.subr.bf16.mxu0 0
    %1318 = vmatpush1.bf16.msra.mxu0 0
    %1319 = vmatprep.mubr.bf16.mxu0 0
    %1320 = vmatmul.mubr.bf16.gmra.mrb[0].mxu0 %v1047
    %v1321 = vpop.f32.mrb[0].mxu0
    %v1322 = vadd.f32 %v1282, %v1321
    %v1323 = vpop.f32.mrb[0].mxu0
    %v1324 = vpop.f32.mrb[0].mxu0
    %v1325 = vpop.f32.mrb[0].mxu0
    %1326 = vdwg.mxu0
    %v1327 = vtanh.pop %v1322
    %v1328 = vpack.c.bf16 %v1327, %v1327
    %1329 = vst [vmem:[#allocation10] sm:$0xf] %v1328
    // Predicated region
    $region46: #{tpu_custom_call.1} parent=1 // pred_check
      _
    $region47: #{tpu_custom_call.1} parent=1 // pred_check_branch
      %1331 = sbr.rel (0) target = $region49
    $region48: #{tpu_custom_call.1} parent=1 // pred_region
      %s1333 = ssub.s32 64, 64
      %1334 = vsyncadd [#allocation4], %s1333
      %s1336 = sshll.u32 [#allocation10], 4
      %s1337 = int_to_ptr.vmem [resolvable:$true] %s1336
      %1339 = dma.vmem_to_hbm [thread:$0]  %s1337, 64, %s7, [#allocation4]
    $region49: #{tpu_custom_call.1} parent=1 // pred_fallthru
      _
    // Predicated region
    $region50: #{tpu_custom_call.1} parent=1 // pred_check
      _
    $region51: #{tpu_custom_call.1} parent=1 // pred_check_branch
      %1341 = sbr.rel (0) target = $region53
    $region52: #{tpu_custom_call.1} parent=1 // pred_region
      %1342 = dma.done [#allocation4], 64
    $region53: #{tpu_custom_call.1} parent=1 // pred_fallthru
      _
    %1343 = vsyncpa [#allocation3], 1
    %1344 = vsyncpa [#allocation6], 1
    %1345 = vsyncpa [#allocation9], 1
    %1346 = vsyncpa [#allocation4], 1

</llo_original>
